<compile_context>
chip_gen: v7x
topology: tpu7x:2x2x1
jax: 0.10.0
libtpu: 0.0.40
codegen_flags: <defaults>
</compile_context>

<pallas_src>
import jax
import jax.numpy as jnp
from jax.experimental import pallas as pl
from jax.experimental.pallas import tpu as pltpu


# -----------------------------------------------------------------------------
# Fast path: two HBM->HBM DMAs, no VMEM staging.
# -----------------------------------------------------------------------------
def _concat_dma_kernel(x_hbm, y_hbm, o_hbm, sem):
    fx = x_hbm.shape[1]
    fy = y_hbm.shape[1]
    cp_x = pltpu.make_async_copy(x_hbm, o_hbm.at[:, pl.ds(0, fx)], sem.at[0])
    cp_y = pltpu.make_async_copy(y_hbm, o_hbm.at[:, pl.ds(fx, fy)], sem.at[1])
    # Issue both before waiting so the two streams overlap on the DMA engines.
    cp_x.start()
    cp_y.start()
    cp_x.wait()
    cp_y.wait()


def _concat_dma(x_flat, y_flat):
    b, fx = x_flat.shape
    fy = y_flat.shape[1]
    itemsize = jnp.dtype(x_flat.dtype).itemsize
    total_bytes = b * (fx + fy) * itemsize
    return pl.pallas_call(
        _concat_dma_kernel,
        out_shape=jax.ShapeDtypeStruct((b, fx + fy), x_flat.dtype),
        in_specs=[
            pl.BlockSpec(memory_space=pl.ANY),
            pl.BlockSpec(memory_space=pl.ANY),
        ],
        out_specs=pl.BlockSpec(memory_space=pl.ANY),
        scratch_shapes=[pltpu.SemaphoreType.DMA((2,))],
        cost_estimate=pl.CostEstimate(
            flops=0, transcendentals=0, bytes_accessed=2 * total_bytes
        ),
    )(x_flat, y_flat)


# -----------------------------------------------------------------------------
# Fallback path: batch-tiled, double-buffered VMEM copy (handles unaligned
# split points and mixed dtypes; unaligned stores are masked but correct).
# -----------------------------------------------------------------------------
def _concat_vmem_kernel(x_ref, y_ref, o_ref):
    fx = x_ref.shape[-1]
    # Any dtype cast rides along on the VPU during the copy (no extra HBM pass).
    o_ref[:, :fx] = x_ref[...].astype(o_ref.dtype)
    o_ref[:, fx:] = y_ref[...].astype(o_ref.dtype)


def _concat_vmem(x_flat, y_flat, out_dtype):
    b, fx = x_flat.shape
    fy = y_flat.shape[1]
    x_item = jnp.dtype(x_flat.dtype).itemsize
    y_item = jnp.dtype(y_flat.dtype).itemsize
    o_item = jnp.dtype(out_dtype).itemsize

    # Bytes of VMEM touched per batch row across all three blocks.
    row_bytes = fx * x_item + fy * y_item + (fx + fy) * o_item
    # Sublane multiple covering the narrowest dtype in play (8 f32 / 16 bf16 / 32 int8).
    sub = max(8, 32 // min(x_item, y_item, o_item))
    # Keep (blocks x double-buffering) comfortably inside scoped VMEM on every
    # generation (v5e default 16 MiB scoped; v7x 32 MiB scoped / 64 MiB physical).
    budget = 8 * 1024 * 1024
    cap = max(sub, (budget // (2 * row_bytes)) // sub * sub)
    tb = b if cap >= b else cap  # whole batch in one block, or a sublane-aligned tile

    # Explicit scoped-VMEM request with slack, clamped below v7x physical VMEM.
    needed = 2 * tb * row_bytes + (4 << 20)
    vmem_limit = int(min(max(needed, 16 << 20), 48 << 20))
    # TODO(synk): extremely wide rows (> ~4 MiB/row) with mixed dtype / unaligned
    # split would need an extra feature-axis tiling pass; not needed for this module.

    grid = (pl.cdiv(b, tb),)
    bytes_accessed = b * (fx * x_item + fy * y_item + (fx + fy) * o_item)
    return pl.pallas_call(
        _concat_vmem_kernel,
        out_shape=jax.ShapeDtypeStruct((b, fx + fy), out_dtype),
        grid=grid,
        in_specs=[
            pl.BlockSpec((tb, fx), lambda i: (i, 0)),
            pl.BlockSpec((tb, fy), lambda i: (i, 0)),
        ],
        out_specs=pl.BlockSpec((tb, fx + fy), lambda i: (i, 0)),
        compiler_params=pltpu.CompilerParams(
            dimension_semantics=("parallel",),  # shard batch tiles over both TCs on v7x
            vmem_limit_bytes=vmem_limit,
        ),
        cost_estimate=pl.CostEstimate(
            flops=0, transcendentals=0, bytes_accessed=bytes_accessed
        ),
    )(x_flat, y_flat)


# -----------------------------------------------------------------------------
# Public wrapper (ConcatLayer.forward equivalent).  jit-compatible: no eager
# syncs or try/except inside; path selection is purely static on shapes/dtypes.
# -----------------------------------------------------------------------------
def concat_layer(x, y):
    """Pallas equivalent of ConcatLayer.forward(x, y)."""
    b = x.shape[0]
    assert y.shape[0] == b, "batch dims must match"
    # Glue: flatten everything after the batch dim (row-major == torch.flatten).
    x_flat = jnp.reshape(x, (b, -1))
    y_flat = jnp.reshape(y, (b, -1))
    fx = x_flat.shape[1]
    out_dtype = jnp.result_type(x_flat.dtype, y_flat.dtype)

    same_dtype = (x_flat.dtype == out_dtype) and (y_flat.dtype == out_dtype)
    if same_dtype and fx % 128 == 0:
        # Pure HBM->HBM DMA concat (no VMEM staging).
        return _concat_dma(x_flat, y_flat)
    return _concat_vmem(x_flat, y_flat, out_dtype)


if __name__ == "__main__":
    key = jax.random.PRNGKey(0)
    kx, ky = jax.random.split(key)

    # Shapes consistent with the forward: trailing dims get flattened.
    x = jax.random.normal(kx, (2, 4, 16, 16), dtype=jnp.float32)  # -> (2, 1024)
    y = jax.random.normal(ky, (2, 8, 16), dtype=jnp.float32)      # -> (2, 128)

    out = concat_layer(x, y)
    out = jax.block_until_ready(out)

    ref = jnp.concatenate(
        [jnp.reshape(x, (x.shape[0], -1)), jnp.reshape(y, (y.shape[0], -1))],
        axis=1,
    )
    assert out.shape == ref.shape, (out.shape, ref.shape)
    assert jnp.array_equal(out, ref), "mismatch vs reference concat (DMA path)"

    # Also exercise the tiled-VMEM fallback (lane-unaligned split point).
    x2 = jax.random.normal(kx, (2, 3, 32), dtype=jnp.float32)     # -> (2, 96)
    y2 = jax.random.normal(ky, (2, 40), dtype=jnp.float32)        # -> (2, 40)
    out2 = jax.block_until_ready(concat_layer(x2, y2))
    ref2 = jnp.concatenate(
        [jnp.reshape(x2, (2, -1)), jnp.reshape(y2, (2, -1))], axis=1
    )
    assert out2.shape == ref2.shape, (out2.shape, ref2.shape)
    assert jnp.array_equal(out2, ref2), "mismatch vs reference concat (VMEM path)"

    # Mixed-dtype fallback (cast fused into the copy on the VPU).
    x3 = jax.random.normal(kx, (2, 4, 32), dtype=jnp.bfloat16)    # -> (2, 128) bf16
    y3 = jax.random.normal(ky, (2, 64), dtype=jnp.float32)        # -> (2, 64)  f32
    out3 = jax.block_until_ready(concat_layer(x3, y3))
    ref3 = jnp.concatenate(
        [jnp.reshape(x3, (2, -1)).astype(jnp.float32), jnp.reshape(y3, (2, -1))],
        axis=1,
    )
    assert out3.shape == ref3.shape, (out3.shape, ref3.shape)
    assert jnp.array_equal(out3, ref3), "mismatch vs reference concat (cast path)"

    print("KERNEL_OK")
</pallas_src>

<mosaic_0001>
module attributes {stable_mosaic.version = 11 : i64} {
  func.func @_concat_dma_kernel(%arg0: memref<2x1024xf32, #tpu.memory_space<any>>, %arg1: memref<2x128xf32, #tpu.memory_space<any>>, %arg2: memref<2x1152xf32, #tpu.memory_space<any>>, %arg3: memref<2x!tpu.dma_semaphore, #tpu.memory_space<semaphore_mem>>) attributes {dimension_semantics = [], scalar_prefetch = 0 : i64, scratch_operands = 1 : i64, tpu.core_type = #tpu.core_type<tc>} {
    %c0_i32 = arith.constant 0 : i32
    %c0_i32_0 = arith.constant 0 : i32
    %c0_i32_1 = arith.constant 0 : i32
    %0 = tpu.memref_slice %arg2[%c0_i32_0, %c0_i32_1] : memref<2x1152xf32, #tpu.memory_space<any>> -> memref<2x1024xf32, #tpu.memory_space<any>>
    %1 = tpu.memref_slice %arg3[%c0_i32] : memref<2x!tpu.dma_semaphore, #tpu.memory_space<semaphore_mem>> -> memref<1x!tpu.dma_semaphore, #tpu.memory_space<semaphore_mem>>
    %2 = tpu.memref_squeeze %1 : memref<1x!tpu.dma_semaphore, #tpu.memory_space<semaphore_mem>> -> memref<!tpu.dma_semaphore, #tpu.memory_space<semaphore_mem>>
    tpu.enqueue_dma source(%arg0 : memref<2x1024xf32, #tpu.memory_space<any>>) target(%0 : memref<2x1024xf32, #tpu.memory_space<any>>) target_semaphore(%2 : memref<!tpu.dma_semaphore, #tpu.memory_space<semaphore_mem>>)
    %c1_i32 = arith.constant 1 : i32
    %c0_i32_2 = arith.constant 0 : i32
    %c1024_i32 = arith.constant 1024 : i32
    %3 = tpu.memref_slice %arg2[%c0_i32_2, %c1024_i32] : memref<2x1152xf32, #tpu.memory_space<any>> -> memref<2x128xf32, #tpu.memory_space<any>>
    %4 = tpu.memref_slice %arg3[%c1_i32] : memref<2x!tpu.dma_semaphore, #tpu.memory_space<semaphore_mem>> -> memref<1x!tpu.dma_semaphore, #tpu.memory_space<semaphore_mem>>
    %5 = tpu.memref_squeeze %4 : memref<1x!tpu.dma_semaphore, #tpu.memory_space<semaphore_mem>> -> memref<!tpu.dma_semaphore, #tpu.memory_space<semaphore_mem>>
    tpu.enqueue_dma source(%arg1 : memref<2x128xf32, #tpu.memory_space<any>>) target(%3 : memref<2x128xf32, #tpu.memory_space<any>>) target_semaphore(%5 : memref<!tpu.dma_semaphore, #tpu.memory_space<semaphore_mem>>)
    %c0_i32_3 = arith.constant 0 : i32
    %c0_i32_4 = arith.constant 0 : i32
    %c0_i32_5 = arith.constant 0 : i32
    %6 = tpu.memref_slice %arg2[%c0_i32_4, %c0_i32_5] : memref<2x1152xf32, #tpu.memory_space<any>> -> memref<2x1024xf32, #tpu.memory_space<any>>
    %7 = tpu.memref_slice %arg3[%c0_i32_3] : memref<2x!tpu.dma_semaphore, #tpu.memory_space<semaphore_mem>> -> memref<1x!tpu.dma_semaphore, #tpu.memory_space<semaphore_mem>>
    %8 = tpu.memref_squeeze %7 : memref<1x!tpu.dma_semaphore, #tpu.memory_space<semaphore_mem>> -> memref<!tpu.dma_semaphore, #tpu.memory_space<semaphore_mem>>
    tpu.wait_dma2 semaphore(%8 : memref<!tpu.dma_semaphore, #tpu.memory_space<semaphore_mem>>) src(%arg0 : memref<2x1024xf32, #tpu.memory_space<any>>) dst(%6 : memref<2x1024xf32, #tpu.memory_space<any>>)
    %c1_i32_6 = arith.constant 1 : i32
    %c0_i32_7 = arith.constant 0 : i32
    %c1024_i32_8 = arith.constant 1024 : i32
    %9 = tpu.memref_slice %arg2[%c0_i32_7, %c1024_i32_8] : memref<2x1152xf32, #tpu.memory_space<any>> -> memref<2x128xf32, #tpu.memory_space<any>>
    %10 = tpu.memref_slice %arg3[%c1_i32_6] : memref<2x!tpu.dma_semaphore, #tpu.memory_space<semaphore_mem>> -> memref<1x!tpu.dma_semaphore, #tpu.memory_space<semaphore_mem>>
    %11 = tpu.memref_squeeze %10 : memref<1x!tpu.dma_semaphore, #tpu.memory_space<semaphore_mem>> -> memref<!tpu.dma_semaphore, #tpu.memory_space<semaphore_mem>>
    tpu.wait_dma2 semaphore(%11 : memref<!tpu.dma_semaphore, #tpu.memory_space<semaphore_mem>>) src(%arg1 : memref<2x128xf32, #tpu.memory_space<any>>) dst(%9 : memref<2x128xf32, #tpu.memory_space<any>>)
    return
  }
}

</mosaic_0001>

<llo_original>
// kernel: tpu_custom_call.1
$region0: #{tpu_custom_call.1}
  #allocation0 [shape = 'u32[]', space=smem, size = 0x4, offset = 0x4, fixed_abs, tag = 'smem constant byte address 0x4 - core index']
  #allocation1 [shape = 'u32[144,128]{1,0:T(1,128)}', space=vmem, size = 0x12000, scoped, tag = 'internal scratch']
  #allocation2 [shape = 's32[2]{0}', space=sflag, size = 0x8, scoped, tag = 'scratch operand']
  #allocation3 [shape = 's32[]', space=sflag, size = 0x4, offset = 0, fixed_abs, tag = 'sflag constant byte address 0x0 - dummy sync flag']
  #allocation4 [shape = 'u32[0]{0}', space=smem, size = 0, offset = 0, fixed_abs, tag = 'smem constant byte address 0x0 - null']
  #allocation5 [shape = 's32[]', space=sflag, size = 0x4, offset = 0, fixed_abs, tag = 'sflag constant byte address 0x0 - dummy sync flag']
  #allocation6 [shape = 's32[]', space=sflag, size = 0x4, offset = 0, fixed_abs, tag = 'sflag constant byte address 0x0 - dummy sync flag']
  #allocation7 [shape = 'u32[]', space=smem, size = 0x4, offset = 0x44, fixed_abs, tag = 'smem constant byte address 0x44 - assertion arg 0']
  #allocation8 [shape = 'u32[]', space=smem, size = 0x4, offset = 0x48, fixed_abs, tag = 'smem constant byte address 0x48 - assertion arg 1']
  %s0 = inlined_call_operand.hbm [shape: f32[2,1024], index: 0, kind: input, shape index: {}]
  %s1 = inlined_call_operand.vmem [shape: f32[2,128], index: 1, kind: input, shape index: {}]
  %s2 = inlined_call_operand.hbm [shape: f32[2,1152], index: 2, kind: output, shape index: {}]
  %s3 = sld [smem:[#allocation0]]
  $region6: #{tpu_custom_call.1} parent=0
    _
  %s5 = ssub.s32 1, %s3
  %s6 = scalar_select 0, %s5, %s3
  %s8 = sshll.u32 1, 14
  %s9 = sxor.u32 4294967295, %s8
  %s12 = sshll.u32 3, 24
  %s13 = sxor.u32 4294967295, %s12
  %s14 = sand.u32 0, %s13
  %s16 = sor.u32 %s14, 0
  %19 = dma.general %s0, 256, %s2, [#allocation2], [#allocation3], [#allocation4], %s16, 0
  %s20 = scalar_lea.hbm %s2, 256
  %s21 = scalar_lea.sflag [#allocation2], 1
  // Predicated region
  $region2: #{tpu_custom_call.1} parent=0 // pred_check
    _
  $region3: #{tpu_custom_call.1} parent=0 // pred_check_branch
    %23 = sbr.rel target = $region5
  $region4: #{tpu_custom_call.1} parent=0 // pred_region
    %24 = sst [smem:[#allocation7]] [#allocation6]
    %25 = sst [smem:[#allocation8]] [#allocation5]
  $region5: #{tpu_custom_call.1} parent=0 // pred_fallthru
    _
  %27 = shalt.err (0)
  %s29 = sshll.u32 %s1, 4
  %s30 = int_to_ptr.vmem [resolvable:$true] %s29
  %32 = dma.vmem_to_hbm [thread:$0]  %s30, 32, %s20, %s21
  %s33 = smul.u32 2, 1
  %s34 = smul.u32 %s33, 8
  %s35 = sshll.u32 %s34, 4
  %36 = dma.done [#allocation2], %s35
  %s37 = smul.u32 %s33, 1
  %s38 = sshll.u32 %s37, 4
  %39 = dma.done %s21, %s38
  %40 = vsyncmov [#allocation2]
  %s41 = vpop.sfrf %40
  %p42 = scmp.eq.s32.totalorder %s41, 0
  %p43 = pneg %p42
  %45 = shalt.err (%p43)
  %s46 = scalar_lea.sflag [#allocation2], 1
  %47 = vsyncmov %s46
  %s48 = vpop.sfrf %47
  %p49 = scmp.eq.s32.totalorder %s48, 0
  %p50 = pneg %p49
  %52 = shalt.err (%p50)

</llo_original>
